<compile_context>
chip_gen: v7x
topology: tpu7x:2x2x1
jax: 0.10.0
libtpu: 0.0.40
codegen_flags: <defaults>
</compile_context>

<pallas_src>
import jax
import jax.numpy as jnp
from jax import lax
from jax.experimental import pallas as pl
from jax.experimental.pallas import tpu as pltpu


def _round_up(x, m):
    return (x + m - 1) // m * m


def _cdiv(a, b):
    return (a + b - 1) // b


# --------------------------------------------------------------------------
# Per-tile VQ kernel: distances -> argmin -> one-hot matmul -> partial MSE.
# --------------------------------------------------------------------------
def _make_vq_tile_kernel(n_e_valid, m_valid, tile_m):
    def vq_tile_kernel(z_ref, emb_ref, esq_ref, zq_ref, idx_ref, psum_ref):
        z = z_ref[...]                       # [tm, E]      f32
        emb = emb_ref[...]                   # [K_pad, E]   f32 (zero-padded rows)
        e_sq = esq_ref[...]                  # [1, K_pad]   f32 (precomputed ||e||^2)
        tm = z.shape[0]
        kp = emb.shape[0]

        # --- distances (||z||^2 dropped: argmin over k is invariant to it) ---
        # f32 cross so the argmin matches the f32 torch reference.
        cross = lax.dot_general(z, emb, (((1,), (1,)), ((), ())),
                                preferred_element_type=jnp.float32)   # [tm, K_pad]
        d = e_sq - 2.0 * cross

        iota_k = lax.broadcasted_iota(jnp.int32, (tm, kp), 1)
        d = jnp.where(iota_k < n_e_valid, d, jnp.inf)    # mask padded codebook rows

        # --- argmin (first occurrence, like torch.argmin) ---
        dmin = jnp.min(d, axis=1, keepdims=True)
        idx = jnp.min(jnp.where(d <= dmin, iota_k, kp), axis=1)       # [tm] int32

        # --- one-hot @ codebook (f32 so z_q is exact codebook rows) ---
        onehot = (iota_k == idx[:, None]).astype(jnp.float32)
        z_q = jnp.dot(onehot, emb, preferred_element_type=jnp.float32)  # [tm, E]

        zq_ref[...] = z_q
        idx_ref[...] = idx.reshape(1, 1, tm)             # lane-dense index slab

        # --- per-tile partial sum of (z_q - z)^2 (ragged-edge rows masked) ---
        row0 = pl.program_id(0) * tile_m
        row_iota = lax.broadcasted_iota(jnp.int32, (tm, 1), 0) + row0
        diff = z_q - z
        partial = jnp.sum(jnp.where(row_iota < m_valid, diff * diff, 0.0))

        lane = lax.broadcasted_iota(jnp.int32, (1, 1, 128), 2)
        psum_ref[...] = jnp.where(lane == 0, partial, 0.0)

    return vq_tile_kernel


# --------------------------------------------------------------------------
# z-independent codebook uniformity / regularization loss, tiled over rows so
# the [K, K] distance matrix is never materialized whole (v7x 64 MiB safe).
# --------------------------------------------------------------------------
def _make_qq_kernel(n_e_valid, tile_kr):
    def qq_kernel(rows_ref, emb_ref, esq_ref, out_ref):
        rows = rows_ref[...]                 # [tile_kr, E]
        emb = emb_ref[...]                   # [K_pad, E]
        e_sq = esq_ref[...]                  # [1, K_pad]
        tr = rows.shape[0]
        kp = emb.shape[0]

        row_sq = jnp.sum(rows * rows, axis=1, keepdims=True)          # [tile_kr, 1]
        cross = lax.dot_general(rows, emb, (((1,), (1,)), ((), ())),
                                preferred_element_type=jnp.float32)   # [tile_kr, K_pad]
        d2 = row_sq + e_sq - 2.0 * cross
        dist = jnp.sqrt(jnp.maximum(d2, 0.0))            # torch.cdist, p=2

        col_iota = lax.broadcasted_iota(jnp.int32, (tr, kp), 1)
        col_valid = col_iota < n_e_valid
        # min includes the diagonal (self distance), same as the torch reference.
        min_d = jnp.min(jnp.where(col_valid, dist, jnp.inf), axis=1, keepdims=True)
        max_d = jnp.max(jnp.where(col_valid, dist, -jnp.inf), axis=1, keepdims=True)

        row0 = pl.program_id(0) * tile_kr
        row_iota = lax.broadcasted_iota(jnp.int32, (tr, 1), 0) + row0
        row_valid = row_iota < n_e_valid
        uniform_partial = jnp.sum(jnp.where(row_valid, max_d - min_d, 0.0))
        reg_partial = jnp.sum(rows * rows)               # padded rows are exact zeros

        lane = lax.broadcasted_iota(jnp.int32, (1, 1, 128), 2)
        out_ref[...] = jnp.where(lane == 0, uniform_partial,
                                 jnp.where(lane == 1, reg_partial, 0.0))

    return qq_kernel


def vector_quantize(z_flat, embedding, *, beta, lambda_reg=0.1,
                    uniform_weight=0.1, tile_m=1024):
    """z_flat: [M, e_dim] f32, embedding: [n_e, e_dim] f32."""
    z_flat = z_flat.astype(jnp.float32)
    embedding = embedding.astype(jnp.float32)
    M, E = z_flat.shape
    K = embedding.shape[0]

    # Codebook axis padded to full 128-lane width; E stays at its true size
    # (block dim == full array dim is exempt from the 128 rule).
    K_pad = _round_up(max(K, 128), 128)

    # Token tile: big enough to amortize the ~0.35us per-step overhead, capped
    # so >= 2 tiles exist when M allows (v7x has 2 TensorCores per chip).
    tm = max(8, min(_round_up(tile_m, 8), _round_up(_cdiv(M, 2), 8)))
    num_tiles = _cdiv(M, tm)

    # Only the tiny codebook is padded/copied on the host side; z / z_q never are.
    emb_p = jnp.pad(embedding, ((0, K_pad - K), (0, 0)))
    e_sq = jnp.sum(emb_p * emb_p, axis=1).reshape(1, K_pad)

    # VMEM budget from actual need (no 32 MiB floor); capped under v7x's 64 MiB/TC.
    vmem_need = (2 * 2 * tm * E * 4            # z in + z_q out, double-buffered
                 + 2 * K_pad * E * 4           # resident codebook
                 + 2 * K_pad * 4               # resident ||e||^2
                 + 2 * (tm + 128) * 4          # idx + psum blocks
                 + 6 * tm * K_pad * 4          # cross / d / iota / onehot temporaries
                 + (2 << 20))                  # headroom
    vmem_limit = int(min(max(vmem_need, 4 << 20), 56 << 20))

    flops = 4 * M * K_pad * E + 10 * M * K_pad
    bytes_accessed = 4 * (2 * M * E + K_pad * E + K_pad
                          + M + num_tiles * 128)   # codebook counted once

    kernel = _make_vq_tile_kernel(K, M, tm)
    zq, idx_slab, psum = pl.pallas_call(
        kernel,
        out_shape=(
            jax.ShapeDtypeStruct((M, E), jnp.float32),              # z_q (true shape)
            jax.ShapeDtypeStruct((num_tiles, 1, tm), jnp.int32),    # index slab
            jax.ShapeDtypeStruct((num_tiles, 1, 128), jnp.float32), # MSE partials
        ),
        grid=(num_tiles,),
        in_specs=[
            pl.BlockSpec((tm, E), lambda i: (i, 0)),
            pl.BlockSpec((K_pad, E), lambda i: (0, 0)),     # codebook resident
            pl.BlockSpec((1, K_pad), lambda i: (0, 0)),     # ||e||^2 resident
        ],
        out_specs=(
            pl.BlockSpec((tm, E), lambda i: (i, 0)),
            pl.BlockSpec((1, 1, tm), lambda i: (i, 0, 0)),
            pl.BlockSpec((1, 1, 128), lambda i: (i, 0, 0)),
        ),
        compiler_params=pltpu.CompilerParams(
            dimension_semantics=("parallel",),
            vmem_limit_bytes=vmem_limit),
        cost_estimate=pl.CostEstimate(
            flops=int(flops), transcendentals=0,
            bytes_accessed=int(bytes_accessed)),
    )(z_flat, emb_p, e_sq)

    indices = idx_slab.reshape(num_tiles * tm)[:M].reshape(M, 1)
    # forward value of mean((sg(z_q)-z)^2) + beta*mean((z_q-sg(z))^2) == (1+beta)*mse
    loss = (1.0 + beta) * jnp.sum(psum) / float(M * E)

    # --- codebook uniformity + L2 regularization ("qq") loss, row-tiled ---
    tile_kr = 128
    num_kr_tiles = K_pad // tile_kr
    qq_parts = pl.pallas_call(
        _make_qq_kernel(K, tile_kr),
        out_shape=jax.ShapeDtypeStruct((num_kr_tiles, 1, 128), jnp.float32),
        grid=(num_kr_tiles,),
        in_specs=[
            pl.BlockSpec((tile_kr, E), lambda i: (i, 0)),
            pl.BlockSpec((K_pad, E), lambda i: (0, 0)),
            pl.BlockSpec((1, K_pad), lambda i: (0, 0)),
        ],
        out_specs=pl.BlockSpec((1, 1, 128), lambda i: (i, 0, 0)),
        compiler_params=pltpu.CompilerParams(
            dimension_semantics=("parallel",),
            vmem_limit_bytes=int(min(max(8 * tile_kr * K_pad * 4 + (2 << 20),
                                         4 << 20), 56 << 20))),
        cost_estimate=pl.CostEstimate(
            flops=int(2 * K_pad * K_pad * E + 8 * K_pad * K_pad),
            transcendentals=int(K_pad * K_pad),
            bytes_accessed=int(4 * (2 * K_pad * E + K_pad + num_kr_tiles * 128))),
    )(emb_p, emb_p, e_sq)

    uniform_loss = jnp.sum(qq_parts[..., 0]) / float(K)
    reg_loss = jnp.sum(qq_parts[..., 1])
    qq = uniform_weight * uniform_loss + lambda_reg * reg_loss

    return zq, indices, loss, qq


class VQVAETransformerPallas:
    """Pallas port of VQVAE_transformer (only the VQ path is defined in the
    reference module's __init__/forward)."""

    def __init__(self, n_embeddings, embedding_dim, beta,
                 lambda_reg=0.1, uniform_weight=0.1, key=None):
        self.n_e = n_embeddings
        self.e_dim = embedding_dim
        self.beta = beta
        self.lambda_reg = lambda_reg
        self.uniform_weight = uniform_weight
        key = jax.random.PRNGKey(0) if key is None else key
        # nn.Embedding weight init: uniform_(-1/n_e, 1/n_e)
        self.embedding = jax.random.uniform(
            key, (self.n_e, self.e_dim), dtype=jnp.float32,
            minval=-1.0 / self.n_e, maxval=1.0 / self.n_e)

    def forward(self, x):
        """x: [N, D, L] float32 (layout identical to the PyTorch tensor)."""
        z = x
        z_flat = z.reshape(-1, self.e_dim)   # same row-major flatten as .view()
        zq_flat, indices, emb_loss, qq_loss = vector_quantize(
            z_flat, self.embedding, beta=self.beta,
            lambda_reg=self.lambda_reg, uniform_weight=self.uniform_weight)
        # straight-through fwd value: z + sg(z_q - z) == z_q
        z_q = zq_flat.reshape(z.shape)
        x_hat = x   # TODO(synk): x_hat is undefined in the reference forward.
        return z_q, x_hat, indices, emb_loss, qq_loss


if __name__ == "__main__":
    # small shapes: N=2, D=4, L=16, embedding_dim=16, n_embeddings=32
    N, D, L = 2, 4, 16
    n_embeddings, embedding_dim, beta = 32, 16, 0.25

    key = jax.random.PRNGKey(0)
    k_x, k_emb = jax.random.split(key)
    x = jax.random.normal(k_x, (N, D, L), dtype=jnp.float32)

    model = VQVAETransformerPallas(n_embeddings, embedding_dim, beta, key=k_emb)
    z_q, x_hat, indices, emb_loss, qq_loss = model.forward(x)
    jax.block_until_ready((z_q, x_hat, indices, emb_loss, qq_loss))

    # sanity: shapes match the PyTorch semantics
    assert z_q.shape == x.shape
    assert indices.shape == (N * D * L // embedding_dim, 1)
    assert emb_loss.shape == () and qq_loss.shape == ()
    print("KERNEL_OK")
</pallas_src>

<mosaic_0001>
module attributes {stable_mosaic.version = 11 : i64} {
  func.func @vq_tile_kernel(%arg0: i32, %arg1: memref<8x16xf32, #tpu.memory_space<vmem>>, %arg2: memref<128x16xf32, #tpu.memory_space<vmem>>, %arg3: memref<1x128xf32, #tpu.memory_space<vmem>>, %arg4: memref<8x16xf32, #tpu.memory_space<vmem>>, %arg5: memref<1x1x8xi32, #tpu.memory_space<vmem>>, %arg6: memref<1x1x128xf32, #tpu.memory_space<vmem>>) attributes {dimension_semantics = [#tpu.dimension_semantics<parallel>], iteration_bounds = array<i64: 1>, scalar_prefetch = 0 : i64, scratch_operands = 0 : i64, tpu.core_type = #tpu.core_type<tc>, window_params = [{transform_indices = @transform_0, window_bounds = array<i64: 8, 16>}, {pipeline_mode = #tpu.pipeline_mode<synchronous>, transform_indices = @transform_1, window_bounds = array<i64: 128, 16>}, {pipeline_mode = #tpu.pipeline_mode<synchronous>, transform_indices = @transform_2, window_bounds = array<i64: 1, 128>}, {transform_indices = @transform_3, window_bounds = array<i64: 8, 16>}, {transform_indices = @transform_4, window_bounds = array<i64: 1, 1, 8>}, {transform_indices = @transform_5, window_bounds = array<i64: 1, 1, 128>}]} {
    %c0 = arith.constant 0 : index
    %c0_0 = arith.constant 0 : index
    %0 = vector.load %arg1[%c0, %c0_0] : memref<8x16xf32, #tpu.memory_space<vmem>>, vector<8x16xf32>
    %c0_1 = arith.constant 0 : index
    %c0_2 = arith.constant 0 : index
    %1 = vector.load %arg2[%c0_1, %c0_2] : memref<128x16xf32, #tpu.memory_space<vmem>>, vector<128x16xf32>
    %c0_3 = arith.constant 0 : index
    %c0_4 = arith.constant 0 : index
    %2 = vector.load %arg3[%c0_3, %c0_4] : memref<1x128xf32, #tpu.memory_space<vmem>>, vector<1x128xf32>
    %cst = arith.constant dense<0.000000e+00> : vector<8x128xf32>
    %3 = tpu.matmul %0, %1, %cst {dimension_numbers = #tpu.dot_dimension_numbers<[1], [1], [0], [0], [0, 0, 1, 0], [], []>} : vector<8x16xf32>, vector<128x16xf32>, vector<8x128xf32> -> vector<8x128xf32>
    %cst_5 = arith.constant 2.000000e+00 : f32
    %4 = vector.broadcast %cst_5 : f32 to vector<8x128xf32>
    %5 = arith.mulf %4, %3 : vector<8x128xf32>
    %6 = vector.broadcast %2 : vector<1x128xf32> to vector<8x128xf32>
    %7 = arith.subf %6, %5 : vector<8x128xf32>
    %8 = tpu.iota {dimensions = array<i32: 1>} : vector<8x128xi32>
    %c32_i32 = arith.constant 32 : i32
    %9 = vector.broadcast %c32_i32 : i32 to vector<8x128xi32>
    %10 = arith.cmpi slt, %8, %9 : vector<8x128xi32>
    %cst_6 = arith.constant 0x7F800000 : f32
    %11 = vector.broadcast %cst_6 : f32 to vector<8x128xf32>
    %12 = arith.select %10, %7, %11 : vector<8x128xi1>, vector<8x128xf32>
    %cst_7 = arith.constant dense<0x7F800000> : vector<8xf32>
    %13 = vector.multi_reduction <minimumf>, %12, %cst_7 [1] : vector<8x128xf32> to vector<8xf32>
    %14 = vector.shape_cast %13 : vector<8xf32> to vector<8x1xf32>
    %15 = vector.broadcast %14 : vector<8x1xf32> to vector<8x128xf32>
    %16 = arith.cmpf ole, %12, %15 : vector<8x128xf32>
    %c128_i32 = arith.constant 128 : i32
    %17 = vector.broadcast %c128_i32 : i32 to vector<8x128xi32>
    %18 = arith.select %16, %8, %17 : vector<8x128xi1>, vector<8x128xi32>
    %cst_8 = arith.constant dense<2147483647> : vector<8xi32>
    %19 = vector.multi_reduction <minsi>, %18, %cst_8 [1] : vector<8x128xi32> to vector<8xi32>
    %20 = vector.shape_cast %19 : vector<8xi32> to vector<8x1xi32>
    %21 = vector.broadcast %20 : vector<8x1xi32> to vector<8x128xi32>
    %22 = arith.cmpi eq, %8, %21 : vector<8x128xi32>
    %23 = arith.extui %22 : vector<8x128xi1> to vector<8x128xi32>
    %24 = arith.sitofp %23 : vector<8x128xi32> to vector<8x128xf32>
    %cst_9 = arith.constant dense<0.000000e+00> : vector<8x16xf32>
    %25 = tpu.matmul %24, %1, %cst_9 {dimension_numbers = #tpu.dot_dimension_numbers<[1], [0], [0], [1], [0, 0, 1, 1], [], []>} : vector<8x128xf32>, vector<128x16xf32>, vector<8x16xf32> -> vector<8x16xf32>
    %c0_10 = arith.constant 0 : index
    %c0_11 = arith.constant 0 : index
    %26 = vector.load %arg4[%c0_10, %c0_11] : memref<8x16xf32, #tpu.memory_space<vmem>>, vector<8x16xf32>
    tpu.vector_store %arg4[%c0_10, %c0_11], %25 {strides = array<i32>} : memref<8x16xf32, #tpu.memory_space<vmem>>, vector<8x16xf32>,
    %27 = vector.shape_cast %19 : vector<8xi32> to vector<1x1x8xi32>
    %c0_12 = arith.constant 0 : index
    %c0_13 = arith.constant 0 : index
    %c0_14 = arith.constant 0 : index
    %28 = vector.load %arg5[%c0_12, %c0_13, %c0_14] : memref<1x1x8xi32, #tpu.memory_space<vmem>>, vector<1x1x8xi32>
    tpu.vector_store %arg5[%c0_12, %c0_13, %c0_14], %27 {strides = array<i32>} : memref<1x1x8xi32, #tpu.memory_space<vmem>>, vector<1x1x8xi32>,
    %c8_i32 = arith.constant 8 : i32
    %29 = arith.muli %arg0, %c8_i32 : i32
    %30 = tpu.iota {dimensions = array<i32: 0>} : vector<8x1xi32>
    %31 = vector.broadcast %29 : i32 to vector<8x1xi32>
    %32 = arith.addi %30, %31 : vector<8x1xi32>
    %33 = arith.subf %25, %0 : vector<8x16xf32>
    %c8_i32_15 = arith.constant 8 : i32
    %34 = vector.broadcast %c8_i32_15 : i32 to vector<8x1xi32>
    %35 = arith.cmpi slt, %32, %34 : vector<8x1xi32>
    %36 = arith.mulf %33, %33 : vector<8x16xf32>
    %cst_16 = arith.constant 0.000000e+00 : f32
    %37 = vector.shape_cast %35 : vector<8x1xi1> to vector<8x1xi1>
    %38 = vector.broadcast %37 : vector<8x1xi1> to vector<8x16xi1>
    %39 = vector.broadcast %cst_16 : f32 to vector<8x16xf32>
    %40 = arith.select %38, %36, %39 : vector<8x16xi1>, vector<8x16xf32>
    %41 = vector.shape_cast %40 : vector<8x16xf32> to vector<1x8x16xf32>
    %cst_17 = arith.constant dense<0.000000e+00> : vector<1xf32>
    %42 = vector.multi_reduction <add>, %41, %cst_17 [1, 2] : vector<1x8x16xf32> to vector<1xf32>
    %43 = vector.shape_cast %42 : vector<1xf32> to vector<1x1x1xf32>
    %44 = vector.extract %43[0, 0, 0] : f32 from vector<1x1x1xf32>
    %45 = tpu.iota {dimensions = array<i32: 2>} : vector<1x1x128xi32>
    %c0_i32 = arith.constant 0 : i32
    %46 = vector.broadcast %c0_i32 : i32 to vector<1x1x128xi32>
    %47 = arith.cmpi eq, %45, %46 : vector<1x1x128xi32>
    %cst_18 = arith.constant 0.000000e+00 : f32
    %48 = vector.broadcast %44 : f32 to vector<1x1x128xf32>
    %49 = vector.broadcast %cst_18 : f32 to vector<1x1x128xf32>
    %50 = arith.select %47, %48, %49 : vector<1x1x128xi1>, vector<1x1x128xf32>
    %c0_19 = arith.constant 0 : index
    %c0_20 = arith.constant 0 : index
    %c0_21 = arith.constant 0 : index
    %51 = vector.load %arg6[%c0_19, %c0_20, %c0_21] : memref<1x1x128xf32, #tpu.memory_space<vmem>>, vector<1x1x128xf32>
    tpu.vector_store %arg6[%c0_19, %c0_20, %c0_21], %50 {strides = array<i32>} : memref<1x1x128xf32, #tpu.memory_space<vmem>>, vector<1x1x128xf32>,
    return
  }
  func.func @transform_0(%arg0: i32) -> (i32, i32) {
    %c0_i32 = arith.constant 0 : i32
    %c0_i32_0 = arith.constant 0 : i32
    return %arg0, %c0_i32 : i32, i32
  }
  func.func @transform_1(%arg0: i32) -> (i32, i32) {
    %c0_i32 = arith.constant 0 : i32
    %c0_i32_0 = arith.constant 0 : i32
    %c0_i32_1 = arith.constant 0 : i32
    return %c0_i32, %c0_i32_0 : i32, i32
  }
  func.func @transform_2(%arg0: i32) -> (i32, i32) {
    %c0_i32 = arith.constant 0 : i32
    %c0_i32_0 = arith.constant 0 : i32
    %c0_i32_1 = arith.constant 0 : i32
    return %c0_i32, %c0_i32_0 : i32, i32
  }
  func.func @transform_3(%arg0: i32) -> (i32, i32) {
    %c0_i32 = arith.constant 0 : i32
    %c0_i32_0 = arith.constant 0 : i32
    return %arg0, %c0_i32 : i32, i32
  }
  func.func @transform_4(%arg0: i32) -> (i32, i32, i32) {
    %c0_i32 = arith.constant 0 : i32
    %c0_i32_0 = arith.constant 0 : i32
    %c0_i32_1 = arith.constant 0 : i32
    return %arg0, %c0_i32, %c0_i32_0 : i32, i32, i32
  }
  func.func @transform_5(%arg0: i32) -> (i32, i32, i32) {
    %c0_i32 = arith.constant 0 : i32
    %c0_i32_0 = arith.constant 0 : i32
    %c0_i32_1 = arith.constant 0 : i32
    return %arg0, %c0_i32, %c0_i32_0 : i32, i32, i32
  }
}

</mosaic_0001>

<llo_original>
// kernel: tpu_custom_call.1
$region0: #{tpu_custom_call.1}
  #allocation0 [shape = 'u32[]', space=smem, size = 0x4, offset = 0x4, fixed_abs, tag = 'smem constant byte address 0x4 - core index']
  #allocation1 [shape = 'u32[144,128]{1,0:T(1,128)}', space=vmem, size = 0x12000, scoped, tag = 'internal scratch']
  %s0 = inlined_call_operand.vmem [shape: f32[8,16], index: 0, kind: input, shape index: {}]
  %s1 = inlined_call_operand.vmem [shape: f32[128,16], index: 1, kind: input, shape index: {}]
  %s2 = inlined_call_operand.vmem [shape: f32[1,128], index: 2, kind: input, shape index: {}]
  %s3 = inlined_call_operand.hbm [shape: f32[8,16], index: 3, kind: output, shape index: {0}]
  %s4 = inlined_call_operand.hbm [shape: s32[1,1,8], index: 4, kind: output, shape index: {1}]
  %s5 = inlined_call_operand.hbm [shape: f32[1,1,128], index: 5, kind: output, shape index: {2}]
  %6 = xla_tuple %s3, %s4, %s5
  %s7 = sld [smem:[#allocation0]]
  $region38: #{tpu_custom_call.1} parent=0
    _
  %s9 = ssub.s32 1, %s7
  %s10 = scalar_select 0, %s9, %s7
  $region1: #{tpu_custom_call.1} parent=0
    #allocation2 [shape = 'u8[4096]{0}', space=vmem, size = 0x1000, scoped, tag = 'output window, operand 0, single buffered']
    #allocation3 [shape = 's32[1]{0}', space=sflag, size = 0x4, scoped, tag = 'scoped memory for tpu_custom_call.1']
    #allocation4 [shape = 'u8[512]{0}', space=vmem, size = 0x400, scoped, tag = 'output window, operand 1, single buffered']
    #allocation5 [shape = 's32[1]{0}', space=sflag, size = 0x4, scoped, tag = 'scoped memory for tpu_custom_call.1']
    #allocation6 [shape = 'u8[512]{0}', space=vmem, size = 0x400, scoped, tag = 'output window, operand 2, single buffered']
    %11 = vsyncpa [#allocation3], 0
    %12 = vsyncpa [#allocation5], 0
    // Predicated region
    $region2: #{tpu_custom_call.1} parent=1 // pred_check
      _
    $region3: #{tpu_custom_call.1} parent=1 // pred_check_branch
      %14 = sbr.rel (0) target = $region5
    $region4: #{tpu_custom_call.1} parent=1 // pred_region
      _
    $region5: #{tpu_custom_call.1} parent=1 // pred_fallthru
      _
    // Predicated region
    $region6: #{tpu_custom_call.1} parent=1 // pred_check
      _
    $region7: #{tpu_custom_call.1} parent=1 // pred_check_branch
      %16 = sbr.rel (0) target = $region9
    $region8: #{tpu_custom_call.1} parent=1 // pred_region
      _
    $region9: #{tpu_custom_call.1} parent=1 // pred_fallthru
      _
    // Predicated region
    $region10: #{tpu_custom_call.1} parent=1 // pred_check
      _
    $region11: #{tpu_custom_call.1} parent=1 // pred_check_branch
      %18 = sbr.rel (0) target = $region13
    $region12: #{tpu_custom_call.1} parent=1 // pred_region
      _
    $region13: #{tpu_custom_call.1} parent=1 // pred_fallthru
      _
    %v19 = vld [vmem:[%s0] sm:$0xff]
    %v20 = vld [vmem:[%s1] sm:$0xff]
    %v21 = vld [vmem:[%s1 + $0x8] sm:$0xff]
    %v22 = vld [vmem:[%s1 + $0x10] sm:$0xff]
    %v23 = vld [vmem:[%s1 + $0x18] sm:$0xff]
    %v24 = vld [vmem:[%s1 + $0x20] sm:$0xff]
    %v25 = vld [vmem:[%s1 + $0x28] sm:$0xff]
    %v26 = vld [vmem:[%s1 + $0x30] sm:$0xff]
    %v27 = vld [vmem:[%s1 + $0x38] sm:$0xff]
    %v28 = vld [vmem:[%s1 + $0x40] sm:$0xff]
    %v29 = vld [vmem:[%s1 + $0x48] sm:$0xff]
    %v30 = vld [vmem:[%s1 + $0x50] sm:$0xff]
    %v31 = vld [vmem:[%s1 + $0x58] sm:$0xff]
    %v32 = vld [vmem:[%s1 + $0x60] sm:$0xff]
    %v33 = vld [vmem:[%s1 + $0x68] sm:$0xff]
    %v34 = vld [vmem:[%s1 + $0x70] sm:$0xff]
    %v35 = vld [vmem:[%s1 + $0x78] sm:$0xff]
    %v36 = vld [vmem:[%s2] sm:$0x1]
    %vm37 = vcmask 130048
    %v39 = vsel %vm37, %v19, 0
    %v42 = vsel %vm37, %v20, 0
    %v45 = vsel %vm37, %v21, 0
    %v48 = vsel %vm37, %v22, 0
    %v51 = vsel %vm37, %v23, 0
    %v54 = vsel %vm37, %v24, 0
    %v57 = vsel %vm37, %v25, 0
    %v60 = vsel %vm37, %v26, 0
    %v63 = vsel %vm37, %v27, 0
    %v66 = vsel %vm37, %v28, 0
    %v69 = vsel %vm37, %v29, 0
    %v72 = vsel %vm37, %v30, 0
    %v75 = vsel %vm37, %v31, 0
    %v78 = vsel %vm37, %v32, 0
    %v81 = vsel %vm37, %v33, 0
    %v84 = vsel %vm37, %v34, 0
    %v87 = vsel %vm37, %v35, 0
    %89 = vmatprep.subr.mxu0 0.0
    %90 = vmatpush1.xpose.msra.mxu0 %v42
    %91 = vmatprep.subr.mxu0 0.0
    %92 = vmatpush1.xpose.msra.mxu0 %v45
    %93 = vmatprep.subr.mxu0 0.0
    %94 = vmatpush1.xpose.msra.mxu0 %v48
    %95 = vmatprep.subr.mxu0 0.0
    %96 = vmatpush1.xpose.msra.mxu0 %v51
    %97 = vmatprep.subr.mxu0 0.0
    %98 = vmatpush1.xpose.msra.mxu0 %v54
    %99 = vmatprep.subr.mxu0 0.0
    %100 = vmatpush1.xpose.msra.mxu0 %v57
    %101 = vmatprep.subr.mxu0 0.0
    %102 = vmatpush1.xpose.msra.mxu0 %v60
    %103 = vmatprep.subr.mxu0 0.0
    %104 = vmatpush1.xpose.msra.mxu0 %v63
    %105 = vmatprep.subr.mxu0 0.0
    %106 = vmatpush1.xpose.msra.mxu0 %v66
    %107 = vmatprep.subr.mxu0 0.0
    %108 = vmatpush1.xpose.msra.mxu0 %v69
    %109 = vmatprep.subr.mxu0 0.0
    %110 = vmatpush1.xpose.msra.mxu0 %v72
    %111 = vmatprep.subr.mxu0 0.0
    %112 = vmatpush1.xpose.msra.mxu0 %v75
    %113 = vmatprep.subr.mxu0 0.0
    %114 = vmatpush1.xpose.msra.mxu0 %v78
    %115 = vmatprep.subr.mxu0 0.0
    %116 = vmatpush1.xpose.msra.mxu0 %v81
    %117 = vmatprep.subr.mxu0 0.0
    %118 = vmatpush1.xpose.msra.mxu0 %v84
    %119 = vmatprep.subr.mxu0 0.0
    %120 = vmatpush1.xpose.msra.mxu0 %v87
    %121 = vmatprep.subr.mxu0 0.0
    %122 = vmatpush1.xpose.msra.mxu0 0.0
    %123 = vmatprep.subr.mxu0 0.0
    %124 = vmatpush1.xpose.msra.mxu0 0.0
    %125 = vmatprep.subr.mxu0 0.0
    %126 = vmatpush1.xpose.msra.mxu0 0.0
    %127 = vmatprep.subr.mxu0 0.0
    %128 = vmatpush1.xpose.msra.mxu0 0.0
    %129 = vmatprep.subr.mxu0 0.0
    %130 = vmatpush1.xpose.msra.mxu0 0.0
    %131 = vmatprep.subr.mxu0 0.0
    %132 = vmatpush1.xpose.msra.mxu0 0.0
    %133 = vmatprep.subr.mxu0 0.0
    %134 = vmatpush1.xpose.msra.mxu0 0.0
    %135 = vmatprep.subr.mxu0 0.0
    %136 = vmatpush1.xpose.msra.mxu0 0.0
    %137 = vmatprep.subr.mxu0 0.0
    %138 = vmatpush1.xpose.msra.mxu0 0.0
    %139 = vmatprep.subr.mxu0 0.0
    %140 = vmatpush1.xpose.msra.mxu0 0.0
    %141 = vmatprep.subr.mxu0 0.0
    %142 = vmatpush1.xpose.msra.mxu0 0.0
    %143 = vmatprep.subr.mxu0 0.0
    %144 = vmatpush1.xpose.msra.mxu0 0.0
    %145 = vmatprep.subr.mxu0 0.0
    %146 = vmatpush1.xpose.msra.mxu0 0.0
    %147 = vmatprep.subr.mxu0 0.0
    %148 = vmatpush1.xpose.msra.mxu0 0.0
    %149 = vmatprep.subr.mxu0 0.0
    %150 = vmatpush1.xpose.msra.mxu0 0.0
    %151 = vmatprep.subr.mxu0 0.0
    %152 = vmatpush1.xpose.msra.mxu0 0.0
    %153 = vmatprep.mubr.f32.mxu0 0.0
    %154 = vmatmul.mubr.f32.gmra.mrb[0].mxu0 %v39
    %v155 = vpop.f32.mrb[0].mxu0
    %v156 = vadd.f32 0.0, %v155
    %v157 = vpop.f32.mrb[0].mxu0
    %158 = vdwg.mxu0
    %v159 = vmul.f32 %v156, 2.0
    %v161 = vlaneseq
    %v162 = vshrl.u32 %v161, 7
    %v163 = vsub.s32 0, %v162
    %v164 = vrot.slane %v36, %v163
    %v166 = vsub.f32 %v164, %v159
    %v167 = vlaneseq
    %v168 = vand.u32 %v167, 127
    %vm169 = vcmp.lt.s32.totalorder %v168, 32
    %v170 = vsel %vm169, %v166, inf
    %171 = vmin.xlane.f32.xlu0 %v170
    %v172 = vpop.xlane.xlu0 %171
    %vm173 = vcmp.le.f32.partialorder %v170, %v172
    %v174 = vsel %vm173, %v168, 128
    %v175 = vand.u32 %v174, 65535
    %v176 = vshra.s32 %v174, 16
    %v177 = vcvt.s32.f32 %v175
    %v178 = vcvt.s32.f32 %v176
    %179 = vmin.xlane.f32.xlu0 %v178
    %v180 = vpop.xlane.xlu0 %179
    %vm181 = vcmp.eq.f32.partialorder %v178, %v180
    %v182 = vsel %vm181, %v177, inf
    %183 = vmin.xlane.f32.xlu0 %v182
    %v184 = vpop.xlane.xlu0 %183
    %v185 = vcvt.f32.s32 %v184
    %v186 = vcvt.f32.s32 %v180
    %v187 = vshll.u32 %v186, 16
    %v188 = vadd.s32 %v187, %v185
    %vm189 = vcmp.eq.s32.totalorder %v168, %v188
    %v190 = vsel %vm189, 1, 0
    %v191 = vcvt.s32.f32 %v190
    %192 = vmatprep.subr.mxu0 0.0
    %193 = vmatpush1.msra.mxu0 %v20
    %194 = vmatprep.subr.mxu0 0.0
    %195 = vmatpush1.msra.mxu0 %v21
    %196 = vmatprep.subr.mxu0 0.0
    %197 = vmatpush1.msra.mxu0 %v22
    %198 = vmatprep.subr.mxu0 0.0
    %199 = vmatpush1.msra.mxu0 %v23
    %200 = vmatprep.subr.mxu0 0.0
    %201 = vmatpush1.msra.mxu0 %v24
    %202 = vmatprep.subr.mxu0 0.0
    %203 = vmatpush1.msra.mxu0 %v25
    %204 = vmatprep.subr.mxu0 0.0
    %205 = vmatpush1.msra.mxu0 %v26
    %206 = vmatprep.subr.mxu0 0.0
    %207 = vmatpush1.msra.mxu0 %v27
    %208 = vmatprep.subr.mxu0 0.0
    %209 = vmatpush1.msra.mxu0 %v28
    %210 = vmatprep.subr.mxu0 0.0
    %211 = vmatpush1.msra.mxu0 %v29
    %212 = vmatprep.subr.mxu0 0.0
    %213 = vmatpush1.msra.mxu0 %v30
    %214 = vmatprep.subr.mxu0 0.0
    %215 = vmatpush1.msra.mxu0 %v31
    %216 = vmatprep.subr.mxu0 0.0
    %217 = vmatpush1.msra.mxu0 %v32
    %218 = vmatprep.subr.mxu0 0.0
    %219 = vmatpush1.msra.mxu0 %v33
    %220 = vmatprep.subr.mxu0 0.0
    %221 = vmatpush1.msra.mxu0 %v34
    %222 = vmatprep.subr.mxu0 0.0
    %223 = vmatpush1.msra.mxu0 %v35
    %224 = vmatprep.subr.mxu0 0.0
    %225 = vmatpush1.msra.mxu0 0.0
    %226 = vmatprep.subr.mxu0 0.0
    %227 = vmatpush1.msra.mxu0 0.0
    %228 = vmatprep.subr.mxu0 0.0
    %229 = vmatpush1.msra.mxu0 0.0
    %230 = vmatprep.subr.mxu0 0.0
    %231 = vmatpush1.msra.mxu0 0.0
    %232 = vmatprep.subr.mxu0 0.0
    %233 = vmatpush1.msra.mxu0 0.0
    %234 = vmatprep.subr.mxu0 0.0
    %235 = vmatpush1.msra.mxu0 0.0
    %236 = vmatprep.subr.mxu0 0.0
    %237 = vmatpush1.msra.mxu0 0.0
    %238 = vmatprep.subr.mxu0 0.0
    %239 = vmatpush1.msra.mxu0 0.0
    %240 = vmatprep.subr.mxu0 0.0
    %241 = vmatpush1.msra.mxu0 0.0
    %242 = vmatprep.subr.mxu0 0.0
    %243 = vmatpush1.msra.mxu0 0.0
    %244 = vmatprep.subr.mxu0 0.0
    %245 = vmatpush1.msra.mxu0 0.0
    %246 = vmatprep.subr.mxu0 0.0
    %247 = vmatpush1.msra.mxu0 0.0
    %248 = vmatprep.subr.mxu0 0.0
    %249 = vmatpush1.msra.mxu0 0.0
    %250 = vmatprep.subr.mxu0 0.0
    %251 = vmatpush1.msra.mxu0 0.0
    %252 = vmatprep.subr.mxu0 0.0
    %253 = vmatpush1.msra.mxu0 0.0
    %254 = vmatprep.subr.mxu0 0.0
    %255 = vmatpush1.msra.mxu0 0.0
    %256 = vmatprep.mubr.f32.mxu0 0.0
    %257 = vmatmul.mubr.f32.gmra.mrb[0].mxu0 %v191
    %v258 = vpop.f32.mrb[0].mxu0
    %v259 = vadd.f32 0.0, %v258
    %v260 = vpop.f32.mrb[0].mxu0
    %261 = vdwg.mxu0
    %262 = vst.msk [vmem:[#allocation2] sm:$0xff] %vm37, %v259
    %v263 = vlaneseq
    %v264 = vshrl.u32 %v263, 7
    %v265 = vsub.s32 %v168, %v264
    %v266 = vrot.slane %v188, %v265
    %vm267 = vcmask 57344
    %268 = vst.msk [vmem:[#allocation4] sm:$0x1] %vm267, %v266
    %s269 = smul.u32 0, 8
    %v270 = vlaneseq
    %v271 = vshrl.u32 %v270, 7
    %v272 = vstv %s269
    %v273 = vadd.s32 %v271, %v272
    %v274 = vsub.f32 %v259, %v19
    %vm275 = vcmp.lt.s32.totalorder %v273, 8
    %v276 = vmul.f32 %v274, %v274
    %v277 = vsel %vm275, 1, 0
    %vm278 = vcmp.eq.s32.totalorder %v277, 1
    %v279 = vsel %vm278, %v276, 0.0
    %v280 = vsel %vm37, %v279, 0.0
    %281 = vadd.xlane.f32.xlu0 %v280
    %v282 = vpop.xlane.xlu0 %281
    %v283 = vrot.slane %v282, 4
    %v284 = vadd.f32 %v282, %v283
    %v285 = vrot.slane %v284, 2
    %v286 = vadd.f32 %v284, %v285
    %v287 = vrot.slane %v286, 1
    %v288 = vadd.f32 %v286, %v287
    %s289 = vtos %v288
    %vm290 = vcmp.eq.s32.totalorder %v168, 0
    %v291 = vstv %s289
    %v292 = vsel %vm290, %v291, 0.0
    %293 = vst [vmem:[#allocation6] sm:$0x1] %v292
    // Predicated region
    $region14: #{tpu_custom_call.1} parent=1 // pred_check
      _
    $region15: #{tpu_custom_call.1} parent=1 // pred_check_branch
      %295 = sbr.rel (0) target = $region17
    $region16: #{tpu_custom_call.1} parent=1 // pred_region
      %s297 = ssub.s32 128, 128
      %298 = vsyncadd [#allocation3], %s297
      %s300 = sshll.u32 [#allocation2], 4
      %s301 = int_to_ptr.vmem [resolvable:$true] %s300
      %303 = dma.vmem_to_hbm [thread:$0]  %s301, 128, %s3, [#allocation3]
    $region17: #{tpu_custom_call.1} parent=1 // pred_fallthru
      _
    // Predicated region
    $region18: #{tpu_custom_call.1} parent=1 // pred_check
      _
    $region19: #{tpu_custom_call.1} parent=1 // pred_check_branch
      %305 = sbr.rel (0) target = $region21
    $region20: #{tpu_custom_call.1} parent=1 // pred_region
      %s307 = ssub.s32 16, 16
      %308 = vsyncadd [#allocation5], %s307
      %s310 = sshll.u32 [#allocation4], 4
      %s311 = int_to_ptr.vmem [resolvable:$true] %s310
      %313 = dma.vmem_to_hbm [thread:$0]  %s311, 16, %s4, [#allocation5]
    $region21: #{tpu_custom_call.1} parent=1 // pred_fallthru
      _
    // Predicated region
    $region22: #{tpu_custom_call.1} parent=1 // pred_check
      _
    $region23: #{tpu_custom_call.1} parent=1 // pred_check_branch
      %315 = sbr.rel (0) target = $region25
    $region24: #{tpu_custom_call.1} parent=1 // pred_region
      %s317 = ssub.s32 16, 16
      %318 = vsyncadd [#allocation5], %s317
      %s320 = sshll.u32 [#allocation6], 4
      %s321 = int_to_ptr.vmem [resolvable:$true] %s320
      %323 = dma.vmem_to_hbm [thread:$0]  %s321, 16, %s5, [#allocation5]
    $region25: #{tpu_custom_call.1} parent=1 // pred_fallthru
      _
    // Predicated region
    $region26: #{tpu_custom_call.1} parent=1 // pred_check
      _
    $region27: #{tpu_custom_call.1} parent=1 // pred_check_branch
      %325 = sbr.rel (0) target = $region29
    $region28: #{tpu_custom_call.1} parent=1 // pred_region
      %326 = dma.done [#allocation3], 128
    $region29: #{tpu_custom_call.1} parent=1 // pred_fallthru
      _
    // Predicated region
    $region30: #{tpu_custom_call.1} parent=1 // pred_check
      _
    $region31: #{tpu_custom_call.1} parent=1 // pred_check_branch
      %328 = sbr.rel (0) target = $region33
    $region32: #{tpu_custom_call.1} parent=1 // pred_region
      %329 = dma.done [#allocation5], 16
    $region33: #{tpu_custom_call.1} parent=1 // pred_fallthru
      _
    // Predicated region
    $region34: #{tpu_custom_call.1} parent=1 // pred_check
      _
    $region35: #{tpu_custom_call.1} parent=1 // pred_check_branch
      %331 = sbr.rel (0) target = $region37
    $region36: #{tpu_custom_call.1} parent=1 // pred_region
      %332 = dma.done [#allocation5], 16
    $region37: #{tpu_custom_call.1} parent=1 // pred_fallthru
      _
    %333 = vsyncpa [#allocation3], 1
    %334 = vsyncpa [#allocation5], 1

</llo_original>
